<compile_context>
chip_gen: v6e
topology: v6e:2x2x1
jax: 0.10.0
libtpu: 0.0.40
codegen_flags: <defaults>
</compile_context>

<pallas_src>
import jax
import jax.numpy as jnp
from jax.experimental import pallas as pl
from jax.experimental.pallas import tpu as pltpu


def _pool_kernel(p_ref, x_ref, o_ref, acc_ref):
    """One (batch, N-tile) grid step.

    p_ref:   (num_pool*K, tn)      all pool matrices stacked, contraction axis on lanes
    x_ref:   (tn, D)               node features for this N tile
    o_ref:   (K, num_pool*D) f32   final concatenated output block
    acc_ref: (num_pool*K, D) f32   accumulator across N tiles
    """
    n = pl.program_id(1)

    @pl.when(n == 0)
    def _init():
        acc_ref[...] = jnp.zeros_like(acc_ref)

    # Single stacked MXU matmul for all pools; one full-width accumulator RMW.
    acc_ref[...] += jnp.dot(p_ref[...], x_ref[...],
                            preferred_element_type=jnp.float32)

    @pl.when(n == pl.num_programs(1) - 1)
    def _flush():
        k = o_ref.shape[0]
        d = x_ref.shape[-1]
        num_pool = acc_ref.shape[0] // k
        # Swizzle (num_pool*K, D) -> (K, num_pool*D) once per batch (cheap,
        # static, sublane-aligned slices).
        for p in range(num_pool):
            o_ref[:, p * d:(p + 1) * d] = (
                acc_ref[p * k:(p + 1) * k, :].astype(o_ref.dtype))


def _round_up(a, b):
    return -(-a // b) * b


def _choose_tile_n(n, d, stacked_k, itemsize, target_x_tile_bytes, vmem_cap_bytes):
    """128-aligned N tile targeting `target_x_tile_bytes` of x per step, capped
    so the double-buffered working set fits `vmem_cap_bytes`."""
    n_pad128 = _round_up(max(n, 1), 128)
    tn = max(128, (target_x_tile_bytes // max(d * itemsize, 1)) // 128 * 128)
    tn = min(tn, n_pad128)

    def working_set(t):
        x_tile = t * d * itemsize
        p_tile = stacked_k * t * itemsize
        out_blk = stacked_k * d * 4           # (K, num_pool*D) f32
        acc = stacked_k * d * 4               # f32 accumulator scratch
        return 2 * (x_tile + p_tile) + 2 * out_blk + acc

    while tn > 128 and working_set(tn) > vmem_cap_bytes:
        tn -= 128
    return tn, working_set(tn)


class PallasPool:
    """Pallas TPU equivalent of the eigenpool `Pool` module (forward only)."""

    def __init__(self, num_pool, pool_matrices, *,
                 compute_dtype=jnp.bfloat16,
                 target_x_tile_bytes=4 << 20,
                 vmem_working_set_cap_bytes=24 << 20):
        pool_matrices = jnp.asarray(pool_matrices)
        assert pool_matrices.ndim == 4 and pool_matrices.shape[0] == num_pool, (
            "expected pool_matrices of shape (num_pool, B, N, K)")
        self.num_pool = num_pool
        self.compute_dtype = compute_dtype
        self.target_x_tile_bytes = target_x_tile_bytes
        self.vmem_cap = vmem_working_set_cap_bytes
        _, self.B, self.N, self.K = pool_matrices.shape

        # One-time layout fix + cast (cached; amortized across forward calls):
        # (num_pool, B, N, K) -> (B, num_pool*K, N), contraction axis on lanes.
        p = jnp.transpose(pool_matrices, (1, 0, 3, 2))            # (B, num_pool, K, N)
        self._p = jnp.asarray(
            p.reshape(self.B, num_pool * self.K, self.N), dtype=compute_dtype)
        self._p_padded = {}   # zero-padded variants keyed by padded N

    def _prepared_p(self, n_pad):
        if n_pad == self.N:
            return self._p
        if n_pad not in self._p_padded:
            self._p_padded[n_pad] = jnp.pad(
                self._p, ((0, 0), (0, 0), (0, n_pad - self.N)))
        return self._p_padded[n_pad]

    def __call__(self, x):
        B, N, D = x.shape
        assert B == self.B and N == self.N, (x.shape, (self.B, self.N))
        itemsize = jnp.dtype(self.compute_dtype).itemsize
        stacked_k = self.num_pool * self.K

        tn, ws = _choose_tile_n(N, D, stacked_k, itemsize,
                                self.target_x_tile_bytes, self.vmem_cap)
        n_pad = _round_up(N, tn)          # never a giant single tile: pad instead
        p = self._prepared_p(n_pad)

        xc = x if x.dtype == self.compute_dtype else x.astype(self.compute_dtype)
        if n_pad != N:
            # Zero rows contribute nothing to P^T x.
            xc = jnp.pad(xc, ((0, 0), (0, n_pad - N), (0, 0)))

        grid = (B, n_pad // tn)
        out_cols = self.num_pool * D

        flops = 2 * B * n_pad * stacked_k * D
        bytes_accessed = (p.size * itemsize + xc.size * itemsize
                          + B * self.K * out_cols * 4)
        vmem_limit = int(min(max(ws * 1.25 + (2 << 20), 16 << 20), 48 << 20))

        return pl.pallas_call(
            _pool_kernel,
            out_shape=jax.ShapeDtypeStruct((B, self.K, out_cols), jnp.float32),
            grid_spec=pltpu.PrefetchScalarGridSpec(
                num_scalar_prefetch=0,
                grid=grid,
                in_specs=[
                    # Stacked pool matrices for batch b, N tile n: (num_pool*K, tn).
                    pl.BlockSpec((None, stacked_k, tn), lambda b, n: (b, 0, n)),
                    # Node features for batch b, N tile n: (tn, D).
                    pl.BlockSpec((None, tn, D), lambda b, n: (b, n, 0)),
                ],
                # Output block invariant across the reduction axis; written once
                # per batch, already in the concatenated lane-dense layout.
                out_specs=pl.BlockSpec((None, self.K, out_cols),
                                       lambda b, n: (b, 0, 0)),
                scratch_shapes=[pltpu.VMEM((stacked_k, D), jnp.float32)],
            ),
            compiler_params=pltpu.CompilerParams(
                dimension_semantics=("parallel", "arbitrary"),
                vmem_limit_bytes=vmem_limit,
            ),
            cost_estimate=pl.CostEstimate(
                flops=int(flops), transcendentals=0,
                bytes_accessed=int(bytes_accessed)),
        )(p, xc)


def pool_reference(pool_matrices, x):
    """Pure-JAX reference mirroring the PyTorch forward."""
    results = []
    for i in range(pool_matrices.shape[0]):
        p = pool_matrices[i].astype(jnp.float32)          # (B, N, K)
        pt = jnp.swapaxes(p, 1, 2)                        # (B, K, N)
        results.append(jnp.einsum("bkn,bnd->bkd", pt, x.astype(jnp.float32)))
    if len(results) > 1:
        return jnp.concatenate(results, axis=2)
    return results[0]


if __name__ == "__main__":
    # Small but tile-friendly shapes consistent with graph pooling.
    num_pool = 2   # Pool(num_pool, pool_matrices)
    B = 2          # batch
    N = 256        # number of nodes (contraction axis)
    K = 16         # pooled clusters per pool matrix
    D = 128        # feature dim (lane-dense)

    key = jax.random.PRNGKey(0)
    k_p, k_x = jax.random.split(key)
    pool_matrices = jax.random.normal(k_p, (num_pool, B, N, K), dtype=jnp.float32)
    x = jax.random.normal(k_x, (B, N, D), dtype=jnp.float32)

    ref = pool_reference(pool_matrices, x)

    # Default path: bf16 operands, f32 accumulation, large auto-chosen N tiles.
    pool_bf16 = PallasPool(num_pool, pool_matrices)
    out = jax.block_until_ready(pool_bf16(x))
    assert out.shape == (B, K, num_pool * D), out.shape
    assert jnp.allclose(out, ref, atol=1.0, rtol=0.02), "bf16 mismatch vs reference"

    # f32 path with a tiny tile target to exercise the multi-tile N reduction.
    pool_f32 = PallasPool(num_pool, pool_matrices, compute_dtype=jnp.float32,
                          target_x_tile_bytes=128 * D * 4)
    out_f32 = jax.block_until_ready(pool_f32(x))
    assert out_f32.shape == (B, K, num_pool * D), out_f32.shape
    assert jnp.allclose(out_f32, ref, atol=1e-3, rtol=1e-5), "f32 mismatch vs reference"

    # Non-128-divisible N: exercises the zero-padding path (no tn=N fallback).
    N2 = 200
    pm2 = jax.random.normal(k_p, (num_pool, B, N2, K), dtype=jnp.float32)
    x2 = jax.random.normal(k_x, (B, N2, D), dtype=jnp.float32)
    ref2 = pool_reference(pm2, x2)
    out2 = jax.block_until_ready(
        PallasPool(num_pool, pm2, compute_dtype=jnp.float32)(x2))
    assert out2.shape == (B, K, num_pool * D), out2.shape
    assert jnp.allclose(out2, ref2, atol=1e-3, rtol=1e-5), "padded-N mismatch vs reference"

    print("KERNEL_OK")
</pallas_src>

<mosaic_0001>
module attributes {stable_mosaic.version = 11 : i64} {
  func.func @_pool_kernel(%arg0: i32, %arg1: i32, %arg2: memref<1x32x256xbf16, #tpu.memory_space<vmem>>, %arg3: memref<1x256x128xbf16, #tpu.memory_space<vmem>>, %arg4: memref<1x16x256xf32, #tpu.memory_space<vmem>>, %arg5: memref<32x128xf32, #tpu.memory_space<vmem>>) attributes {dimension_semantics = [#tpu.dimension_semantics<parallel>, #tpu.dimension_semantics<arbitrary>], iteration_bounds = array<i64: 2, 1>, scalar_prefetch = 0 : i64, scratch_operands = 1 : i64, tpu.core_type = #tpu.core_type<tc>, window_params = [{transform_indices = @transform_0, window_bounds = array<i64: 1, 32, 256>}, {transform_indices = @transform_1, window_bounds = array<i64: 1, 256, 128>}, {transform_indices = @transform_2, window_bounds = array<i64: 1, 16, 256>}]} {
    %c0_i32 = arith.constant 0 : i32
    %0 = arith.cmpi eq, %arg1, %c0_i32 : i32
    %1 = arith.extui %0 : i1 to i32
    %c0_i32_0 = arith.constant 0 : i32
    %2 = arith.cmpi ne, %1, %c0_i32_0 : i32
    scf.if %2 {
      %cst_12 = arith.constant 0.000000e+00 : f32
      %14 = vector.broadcast %cst_12 : f32 to vector<32x128xf32>
      %c0_13 = arith.constant 0 : index
      %c0_14 = arith.constant 0 : index
      %15 = vector.load %arg5[%c0_13, %c0_14] : memref<32x128xf32, #tpu.memory_space<vmem>>, vector<32x128xf32>
      tpu.vector_store %arg5[%c0_13, %c0_14], %14 {strides = array<i32>} : memref<32x128xf32, #tpu.memory_space<vmem>>, vector<32x128xf32>,
    } else {
    }
    %c0 = arith.constant 0 : index
    %c0_1 = arith.constant 0 : index
    %3 = vector.load %arg5[%c0, %c0_1] : memref<32x128xf32, #tpu.memory_space<vmem>>, vector<32x128xf32>
    %c0_2 = arith.constant 0 : index
    %c0_3 = arith.constant 0 : index
    %c0_4 = arith.constant 0 : index
    %4 = vector.load %arg2[%c0_2, %c0_3, %c0_4] : memref<1x32x256xbf16, #tpu.memory_space<vmem>>, vector<1x32x256xbf16>
    %5 = vector.shape_cast %4 : vector<1x32x256xbf16> to vector<32x256xbf16>
    %c0_5 = arith.constant 0 : index
    %c0_6 = arith.constant 0 : index
    %c0_7 = arith.constant 0 : index
    %6 = vector.load %arg3[%c0_5, %c0_6, %c0_7] : memref<1x256x128xbf16, #tpu.memory_space<vmem>>, vector<1x256x128xbf16>
    %7 = vector.shape_cast %6 : vector<1x256x128xbf16> to vector<256x128xbf16>
    %cst = arith.constant dense<0.000000e+00> : vector<32x128xf32>
    %8 = tpu.matmul %5, %7, %cst {dimension_numbers = #tpu.dot_dimension_numbers<[1], [0], [0], [1], [0, 0, 1, 1], [], []>} : vector<32x256xbf16>, vector<256x128xbf16>, vector<32x128xf32> -> vector<32x128xf32>
    %9 = arith.addf %3, %8 : vector<32x128xf32>
    %c0_8 = arith.constant 0 : index
    %c0_9 = arith.constant 0 : index
    %10 = vector.load %arg5[%c0_8, %c0_9] : memref<32x128xf32, #tpu.memory_space<vmem>>, vector<32x128xf32>
    tpu.vector_store %arg5[%c0_8, %c0_9], %9 {strides = array<i32>} : memref<32x128xf32, #tpu.memory_space<vmem>>, vector<32x128xf32>,
    %c0_i32_10 = arith.constant 0 : i32
    %11 = arith.cmpi eq, %arg1, %c0_i32_10 : i32
    %12 = arith.extui %11 : i1 to i32
    %c0_i32_11 = arith.constant 0 : i32
    %13 = arith.cmpi ne, %12, %c0_i32_11 : i32
    scf.if %13 {
      %c0_12 = arith.constant 0 : index
      %c0_13 = arith.constant 0 : index
      %14 = vector.load %arg5[%c0_12, %c0_13] : memref<32x128xf32, #tpu.memory_space<vmem>>, vector<16x128xf32>
      %c0_14 = arith.constant 0 : index
      %c0_15 = arith.constant 0 : index
      %c0_16 = arith.constant 0 : index
      %15 = vector.load %arg4[%c0_14, %c0_15, %c0_16] : memref<1x16x256xf32, #tpu.memory_space<vmem>>, vector<1x16x128xf32>
      %16 = vector.shape_cast %15 : vector<1x16x128xf32> to vector<16x128xf32>
      %17 = vector.shape_cast %14 : vector<16x128xf32> to vector<1x16x128xf32>
      tpu.vector_store %arg4[%c0_14, %c0_15, %c0_16], %17 {strides = array<i32>} : memref<1x16x256xf32, #tpu.memory_space<vmem>>, vector<1x16x128xf32>,
      %c16 = arith.constant 16 : index
      %c0_17 = arith.constant 0 : index
      %18 = vector.load %arg5[%c16, %c0_17] : memref<32x128xf32, #tpu.memory_space<vmem>>, vector<16x128xf32>
      %c0_18 = arith.constant 0 : index
      %c0_19 = arith.constant 0 : index
      %c128 = arith.constant 128 : index
      %19 = vector.load %arg4[%c0_18, %c0_19, %c128] : memref<1x16x256xf32, #tpu.memory_space<vmem>>, vector<1x16x128xf32>
      %20 = vector.shape_cast %19 : vector<1x16x128xf32> to vector<16x128xf32>
      %21 = vector.shape_cast %18 : vector<16x128xf32> to vector<1x16x128xf32>
      tpu.vector_store %arg4[%c0_18, %c0_19, %c128], %21 {strides = array<i32>} : memref<1x16x256xf32, #tpu.memory_space<vmem>>, vector<1x16x128xf32>,
    } else {
    }
    return
  }
  func.func @transform_0(%arg0: i32, %arg1: i32) -> (i32, i32, i32) {
    %c0_i32 = arith.constant 0 : i32
    %c0_i32_0 = arith.constant 0 : i32
    return %arg0, %c0_i32, %arg1 : i32, i32, i32
  }
  func.func @transform_1(%arg0: i32, %arg1: i32) -> (i32, i32, i32) {
    %c0_i32 = arith.constant 0 : i32
    %c0_i32_0 = arith.constant 0 : i32
    return %arg0, %arg1, %c0_i32 : i32, i32, i32
  }
  func.func @transform_2(%arg0: i32, %arg1: i32) -> (i32, i32, i32) {
    %c0_i32 = arith.constant 0 : i32
    %c0_i32_0 = arith.constant 0 : i32
    %c0_i32_1 = arith.constant 0 : i32
    return %arg0, %c0_i32, %c0_i32_0 : i32, i32, i32
  }
}

</mosaic_0001>

<llo_original>
// kernel: tpu_custom_call.1
$region0: #{tpu_custom_call.1}
  #allocation0 [shape = 'u32[]', space=smem, size = 0x4, offset = 0x4, fixed_abs, tag = 'smem constant byte address 0x4 - core index']
  #allocation1 [shape = 'u32[144,128]{1,0:T(1,128)}', space=vmem, size = 0x12000, scoped, tag = 'internal scratch']
  #allocation2 [shape = 'f32[32,128]{1,0:T(8,128)}', space=vmem, size = 0x4000, scoped, tag = 'scratch operand']
  %s0 = inlined_call_operand.hbm [shape: bf16[2,32,256], index: 0, kind: input, shape index: {}]
  %s1 = inlined_call_operand.hbm [shape: bf16[2,256,128], index: 1, kind: input, shape index: {}]
  %s2 = inlined_call_operand.hbm [shape: f32[2,16,256], index: 2, kind: output, shape index: {}]
  %s3 = sld [smem:[#allocation0]]
  $region57: #{tpu_custom_call.1} parent=0
    _
  %s5 = ssub.s32 1, %s3
  %s6 = scalar_select 0, %s5, %s3
  $region1: #{tpu_custom_call.1} parent=0
    #allocation3 [shape = 'u8[32768]{0}', space=vmem, size = 0x8000, scoped, tag = 'input window, operand 0']
    #allocation4 [shape = 's32[2]{0}', space=sflag, size = 0x8, scoped, tag = 'scoped memory for tpu_custom_call.1']
    #allocation5 [shape = 's32[2]{0}', space=sflag, size = 0x8, scoped, tag = 'scoped memory for tpu_custom_call.1']
    #allocation6 [shape = 'u8[131072]{0}', space=vmem, size = 0x20000, scoped, tag = 'input window, operand 1']
    #allocation7 [shape = 's32[2]{0}', space=sflag, size = 0x8, scoped, tag = 'scoped memory for tpu_custom_call.1']
    #allocation8 [shape = 'u8[32768]{0}', space=vmem, size = 0x8000, scoped, tag = 'output window, operand 0']
    %7 = vsyncpa [#allocation4], 0
    %s8 = scalar_lea.sflag [#allocation4], 1
    %9 = vsyncpa %s8, 0
    %10 = vsyncpa [#allocation7], 0
    %s11 = scalar_lea.sflag [#allocation7], 1
    %12 = vsyncpa %s11, 0
    %13 = vsyncpa [#allocation5], 0
    %s14 = scalar_lea.sflag [#allocation5], 1
    %15 = vsyncpa %s14, 0
    loop: start=0, step=1, limit=4
    $region2: #{tpu_custom_call.1} parent=1 // loop_pre_header
      _
    $region3: #{tpu_custom_call.1} parent=1 // loop_header
      %s17 = sphi 0, %s21
      %p18 = scmp.ge.s32.totalorder %s17, 4
      %s24 = sphi 0, %s36
      %s25 = sphi 0, %s32
      %s26 = sphi 0, %s24
      %s27 = sphi 0, %s25
      %s28 = sphi 0, %s26
      %s29 = sphi 0, %s27
      %s41 = sphi 0, %s43
      %s44 = sphi 0, %s41
      %s45 = sphi 0, %s44
      %s61 = sphi 0, %s45
      %s69 = sphi 0, %s71
      %s72 = sphi 0, %s69
      %s73 = sphi 0, %s72
      %s89 = sphi 0, %s73
      %s95 = sphi 0, %s97
      %s98 = sphi 0, %s95
      %s99 = sphi 0, %s98
      %s115 = sphi 0, %s99
    $region4: #{tpu_custom_call.1} parent=1 // loop_header_branch
      %20 = sbr.rel (%p18) target = $region8
    $region5: #{tpu_custom_call.1} parent=1 // loop_body
      %s22 = ssub.s32 %s17, 1
      %s23 = ssub.s32 %s17, 2
      %s30 = sadd.s32 1, %s25
      %p31 = scmp.ge.s32.totalorder %s30, 1
      %s32 = scalar_select %p31, 0, %s30
      %s33 = sadd.s32 1, %s24
      %s34 = scalar_select %p31, %s33, %s24
      %p35 = scmp.ge.s32.totalorder %s34, 2
      %s36 = scalar_select %p35, 0, %s34
      %s37 = ssub.s32 %s24, %s36
      %s38 = ssub.s32 %s25, %s32
      %s39 = sor.u32 %s37, %s38
      %p40 = scmp.eq.s32.totalorder %s39, 0
      %s42 = sadd.s32 %s41, 1
      %s43 = scalar_select %p40, %s41, %s42
      %p46 = pneg %p40
      %p47 = scmp.eq.s32.totalorder %s17, 1
      %p48 = por %p46, %p47
      %p49 = scmp.ne.s32.totalorder %s41, %s44
      %p50 = scmp.eq.s32.totalorder %s17, 0
      %p51 = por %p49, %p50
      %p52 = scmp.ne.s32.totalorder %s41, %s44
      %p53 = scmp.eq.s32.totalorder %s22, 1
      %p54 = por %p52, %p53
      %p55 = scmp.ne.s32.totalorder %s44, %s45
      %p56 = scmp.eq.s32.totalorder %s22, 0
      %p57 = por %p55, %p56
      %p58 = scmp.ne.s32.totalorder %s44, %s45
      %p59 = scmp.eq.s32.totalorder %s23, 1
      %p60 = por %p58, %p59
      %p62 = scmp.ne.s32.totalorder %s45, %s61
      %p63 = scmp.eq.s32.totalorder %s23, 0
      %p64 = por %p62, %p63
      %s65 = ssub.s32 %s24, %s36
      %s66 = ssub.s32 %s25, %s32
      %s67 = sor.u32 %s65, %s66
      %p68 = scmp.eq.s32.totalorder %s67, 0
      %s70 = sadd.s32 %s69, 1
      %s71 = scalar_select %p68, %s69, %s70
      %p74 = pneg %p68
      %p75 = scmp.eq.s32.totalorder %s17, 1
      %p76 = por %p74, %p75
      %p77 = scmp.ne.s32.totalorder %s69, %s72
      %p78 = scmp.eq.s32.totalorder %s17, 0
      %p79 = por %p77, %p78
      %p80 = scmp.ne.s32.totalorder %s69, %s72
      %p81 = scmp.eq.s32.totalorder %s22, 1
      %p82 = por %p80, %p81
      %p83 = scmp.ne.s32.totalorder %s72, %s73
      %p84 = scmp.eq.s32.totalorder %s22, 0
      %p85 = por %p83, %p84
      %p86 = scmp.ne.s32.totalorder %s72, %s73
      %p87 = scmp.eq.s32.totalorder %s23, 1
      %p88 = por %p86, %p87
      %p90 = scmp.ne.s32.totalorder %s73, %s89
      %p91 = scmp.eq.s32.totalorder %s23, 0
      %p92 = por %p90, %p91
      %s93 = ssub.s32 %s24, %s36
      %p94 = scmp.eq.s32.totalorder %s93, 0
      %s96 = sadd.s32 %s95, 1
      %s97 = scalar_select %p94, %s95, %s96
      %p100 = pneg %p94
      %p101 = scmp.eq.s32.totalorder %s17, 1
      %p102 = por %p100, %p101
      %p103 = scmp.ne.s32.totalorder %s95, %s98
      %p104 = scmp.eq.s32.totalorder %s17, 0
      %p105 = por %p103, %p104
      %p106 = scmp.ne.s32.totalorder %s95, %s98
      %p107 = scmp.eq.s32.totalorder %s22, 1
      %p108 = por %p106, %p107
      %p109 = scmp.ne.s32.totalorder %s98, %s99
      %p110 = scmp.eq.s32.totalorder %s22, 0
      %p111 = por %p109, %p110
      %p112 = scmp.ne.s32.totalorder %s98, %s99
      %p113 = scmp.eq.s32.totalorder %s23, 1
      %p114 = por %p112, %p113
      %p116 = scmp.ne.s32.totalorder %s99, %s115
      %p117 = scmp.eq.s32.totalorder %s23, 0
      %p118 = por %p116, %p117
      %p119 = scmp.le.s32.totalorder 1, %s17
      %p120 = scmp.lt.s32.totalorder %s17, 3
      %p121 = pnand %p119, %p120
      %p122 = pneg %p121
      // Predicated region
      $region9: #{tpu_custom_call.1} parent=5 // pred_check
        _
      $region10: #{tpu_custom_call.1} parent=5 // pred_check_branch
        %124 = sbr.rel (%p121) target = $region12
      $region11: #{tpu_custom_call.1} parent=5 // pred_region
        %s125 = ssub.s32 %s17, 1
      $region12: #{tpu_custom_call.1} parent=5 // pred_fallthru
        _
      %p126 = scmp.lt.s32.totalorder %s17, 2
      // Predicated region
      $region13: #{tpu_custom_call.1} parent=5 // pred_check
        %p127 = pneg %p126
      $region14: #{tpu_custom_call.1} parent=5 // pred_check_branch
        %129 = sbr.rel (%p127) target = $region16
      $region15: #{tpu_custom_call.1} parent=5 // pred_region
        // Predicated region
        $region17: #{tpu_custom_call.1} parent=15 // pred_check
          %p130 = pneg %p51
        $region18: #{tpu_custom_call.1} parent=15 // pred_check_branch
          %132 = sbr.rel (%p130) target = $region20
        $region19: #{tpu_custom_call.1} parent=15 // pred_region
          %s133 = sand.u32 %s41, 1
          %s134 = scalar_lea.sflag [#allocation4], %s133
          %s135 = sand.u32 %s41, 1
          %s136 = smul.addr %s135, 32
          %s137 = scalar_lea.vmem [#allocation3], %s136
          %s138 = smul.u32 2, %s25
          %s140 = ssub.s32 512, 512
          %141 = vsyncadd %s134, %s140
          %s142 = smul.addr %s24, 8
          %s143 = sadd.s32 %s138, %s142
          %s144 = smul.addr %s143, 64
          %s145 = scalar_lea.hbm %s0, %s144
          %s146 = sshll.u32 %s137, 4
          %s147 = int_to_ptr.vmem [resolvable:$true] %s146
          %152 = dma.hbm_to_vmem [thread:$0]  %s145, 512, %s147, %s134, 128, 128, 8
        $region20: #{tpu_custom_call.1} parent=15 // pred_fallthru
          _
        // Predicated region
        $region21: #{tpu_custom_call.1} parent=15 // pred_check
          %p153 = pneg %p79
        $region22: #{tpu_custom_call.1} parent=15 // pred_check_branch
          %155 = sbr.rel (%p153) target = $region24
        $region23: #{tpu_custom_call.1} parent=15 // pred_region
          %s156 = sand.u32 %s69, 1
          %s157 = scalar_lea.sflag [#allocation7], %s156
          %s158 = sand.u32 %s69, 1
          %s159 = smul.addr %s158, 128
          %s160 = scalar_lea.vmem [#allocation6], %s159
          %s161 = smul.u32 32, %s25
          %s163 = ssub.s32 2048, 2048
          %164 = vsyncadd %s157, %s163
          %s165 = smul.addr %s24, 32
          %s166 = sadd.s32 %s161, %s165
          %s167 = smul.addr %s166, 64
          %s168 = scalar_lea.hbm %s1, %s167
          %s169 = sshll.u32 %s160, 4
          %s170 = int_to_ptr.vmem [resolvable:$true] %s169
          %175 = dma.hbm_to_vmem [thread:$0]  %s168, 2048, %s170, %s157, 64, 64, 4
        $region24: #{tpu_custom_call.1} parent=15 // pred_fallthru
          _
      $region16: #{tpu_custom_call.1} parent=5 // pred_fallthru
        _
      %p176 = scmp.le.s32.totalorder 1, %s17
      %p177 = scmp.lt.s32.totalorder %s17, 3
      %p178 = pnand %p176, %p177
      %p179 = pneg %p178
      // Predicated region
      $region25: #{tpu_custom_call.1} parent=5 // pred_check
        _
      $region26: #{tpu_custom_call.1} parent=5 // pred_check_branch
        %181 = sbr.rel (%p178) target = $region28
      $region27: #{tpu_custom_call.1} parent=5 // pred_region
        %s182 = ssub.s32 %s17, 1
        %s183 = sand.u32 %s44, 1
        %s184 = scalar_lea.sflag [#allocation4], %s183
        %s185 = sand.u32 %s44, 1
        %s186 = smul.addr %s185, 32
        %s187 = scalar_lea.vmem [#allocation3], %s186
        // Predicated region
        $region29: #{tpu_custom_call.1} parent=27 // pred_check
          %p188 = pneg %p57
        $region30: #{tpu_custom_call.1} parent=27 // pred_check_branch
          %190 = sbr.rel (%p188) target = $region32
        $region31: #{tpu_custom_call.1} parent=27 // pred_region
          %191 = dma.done %s184, 512
        $region32: #{tpu_custom_call.1} parent=27 // pred_fallthru
          _
        %s192 = sand.u32 %s72, 1
        %s193 = scalar_lea.sflag [#allocation7], %s192
        %s194 = sand.u32 %s72, 1
        %s195 = smul.addr %s194, 128
        %s196 = scalar_lea.vmem [#allocation6], %s195
        // Predicated region
        $region33: #{tpu_custom_call.1} parent=27 // pred_check
          %p197 = pneg %p85
        $region34: #{tpu_custom_call.1} parent=27 // pred_check_branch
          %199 = sbr.rel (%p197) target = $region36
        $region35: #{tpu_custom_call.1} parent=27 // pred_region
          %200 = dma.done %s193, 2048
        $region36: #{tpu_custom_call.1} parent=27 // pred_fallthru
          _
        %s201 = sand.u32 %s44, 1
        %s202 = scalar_lea.sflag [#allocation4], %s201
        %s203 = sand.u32 %s44, 1
        %s204 = smul.addr %s203, 32
        %s205 = scalar_lea.vmem [#allocation3], %s204
        %p206 = pneg %p57
        %p207 = pneg %p54
        %s208 = sand.u32 %s72, 1
        %s209 = scalar_lea.sflag [#allocation7], %s208
        %s210 = sand.u32 %s72, 1
        %s211 = smul.addr %s210, 128
        %s212 = scalar_lea.vmem [#allocation6], %s211
        %p213 = pneg %p85
        %p214 = pneg %p82
        %p215 = pneg %p111
        %p216 = pneg %p108
        %s217 = sand.u32 %s98, 1
        %s218 = scalar_lea.sflag [#allocation5], %s217
        %s219 = sand.u32 %s98, 1
        %s220 = smul.addr %s219, 32
        %s221 = scalar_lea.vmem [#allocation8], %s220
        %s222 = smul.u32 2, %s27
        %s223 = smul.u32 32, %s27
        %p225 = scmp.eq.s32.totalorder %s27, 0
        // Predicated region
        $region37: #{tpu_custom_call.1} parent=27 // pred_check
          %p226 = pneg %p225
        $region38: #{tpu_custom_call.1} parent=27 // pred_check_branch
          %228 = sbr.rel (%p226) target = $region40
        $region39: #{tpu_custom_call.1} parent=27 // pred_region
          %229 = vst [vmem:[#allocation2] sm:$0xff] 0.0
          %230 = vst [vmem:[#allocation2 + $0x8] sm:$0xff] 0.0
          %231 = vst [vmem:[#allocation2 + $0x10] sm:$0xff] 0.0
          %232 = vst [vmem:[#allocation2 + $0x18] sm:$0xff] 0.0
        $region40: #{tpu_custom_call.1} parent=27 // pred_fallthru
          _
        %v233 = vld [vmem:[#allocation2] sm:$0xff]
        %v234 = vld [vmem:[#allocation2 + $0x8] sm:$0xff]
        %v235 = vld [vmem:[#allocation2 + $0x10] sm:$0xff]
        %v236 = vld [vmem:[#allocation2 + $0x18] sm:$0xff]
        %v237 = vld [vmem:[%s187] sm:$0xff]
        %v238 = vld [vmem:[%s187 + $0x8] sm:$0xff]
        %v239 = vld [vmem:[%s187 + $0x10] sm:$0xff]
        %v240 = vld [vmem:[%s187 + $0x18] sm:$0xff]
        %v241 = vld [vmem:[%s196] sm:$0xf]
        %v242 = vld [vmem:[%s196 + $0x4] sm:$0xf]
        %v243 = vld [vmem:[%s196 + $0x8] sm:$0xf]
        %v244 = vld [vmem:[%s196 + $0xc] sm:$0xf]
        %v245 = vld [vmem:[%s196 + $0x10] sm:$0xf]
        %v246 = vld [vmem:[%s196 + $0x14] sm:$0xf]
        %v247 = vld [vmem:[%s196 + $0x18] sm:$0xf]
        %v248 = vld [vmem:[%s196 + $0x1c] sm:$0xf]
        %v249 = vld [vmem:[%s196 + $0x20] sm:$0xf]
        %v250 = vld [vmem:[%s196 + $0x24] sm:$0xf]
        %v251 = vld [vmem:[%s196 + $0x28] sm:$0xf]
        %v252 = vld [vmem:[%s196 + $0x2c] sm:$0xf]
        %v253 = vld [vmem:[%s196 + $0x30] sm:$0xf]
        %v254 = vld [vmem:[%s196 + $0x34] sm:$0xf]
        %v255 = vld [vmem:[%s196 + $0x38] sm:$0xf]
        %v256 = vld [vmem:[%s196 + $0x3c] sm:$0xf]
        %v257 = vld [vmem:[%s196 + $0x40] sm:$0xf]
        %v258 = vld [vmem:[%s196 + $0x44] sm:$0xf]
        %v259 = vld [vmem:[%s196 + $0x48] sm:$0xf]
        %v260 = vld [vmem:[%s196 + $0x4c] sm:$0xf]
        %v261 = vld [vmem:[%s196 + $0x50] sm:$0xf]
        %v262 = vld [vmem:[%s196 + $0x54] sm:$0xf]
        %v263 = vld [vmem:[%s196 + $0x58] sm:$0xf]
        %v264 = vld [vmem:[%s196 + $0x5c] sm:$0xf]
        %v265 = vld [vmem:[%s196 + $0x60] sm:$0xf]
        %v266 = vld [vmem:[%s196 + $0x64] sm:$0xf]
        %v267 = vld [vmem:[%s196 + $0x68] sm:$0xf]
        %v268 = vld [vmem:[%s196 + $0x6c] sm:$0xf]
        %v269 = vld [vmem:[%s196 + $0x70] sm:$0xf]
        %v270 = vld [vmem:[%s196 + $0x74] sm:$0xf]
        %v271 = vld [vmem:[%s196 + $0x78] sm:$0xf]
        %v272 = vld [vmem:[%s196 + $0x7c] sm:$0xf]
        %v277 = vunpack.c.l.b16 %v237
        %v278 = vunpack.c.h.b16 %v237
        %v279 = vunpack.c.l.b16 %v238
        %v280 = vunpack.c.h.b16 %v238
        %v281 = vunpack.c.l.b16 %v239
        %v282 = vunpack.c.h.b16 %v239
        %v283 = vunpack.c.l.b16 %v240
        %v284 = vunpack.c.h.b16 %v240
        %v285 = vpack.c.b16 %v279, %v277
        %v286 = vpack.c.b16 %v280, %v278
        %v287 = vpack.c.b16 %v283, %v281
        %v288 = vpack.c.b16 %v284, %v282
        %v325 = vunpack.c.l.b16 %v241
        %v326 = vunpack.c.l.b16 %v242
        %v327 = vunpack.c.l.b16 %v243
        %v328 = vunpack.c.l.b16 %v244
        %v329 = vunpack.c.l.b16 %v245
        %v330 = vunpack.c.l.b16 %v246
        %v331 = vunpack.c.l.b16 %v247
        %v332 = vunpack.c.l.b16 %v248
        %v333 = vunpack.c.l.b16 %v249
        %v334 = vunpack.c.l.b16 %v250
        %v335 = vunpack.c.l.b16 %v251
        %v336 = vunpack.c.l.b16 %v252
        %v337 = vunpack.c.l.b16 %v253
        %v338 = vunpack.c.l.b16 %v254
        %v339 = vunpack.c.l.b16 %v255
        %v340 = vunpack.c.l.b16 %v256
        %v341 = vunpack.c.l.b16 %v257
        %v342 = vunpack.c.l.b16 %v258
        %v343 = vunpack.c.l.b16 %v259
        %v344 = vunpack.c.l.b16 %v260
        %v345 = vunpack.c.l.b16 %v261
        %v346 = vunpack.c.l.b16 %v262
        %v347 = vunpack.c.l.b16 %v263
        %v348 = vunpack.c.l.b16 %v264
        %v349 = vunpack.c.l.b16 %v265
        %v350 = vunpack.c.l.b16 %v266
        %v351 = vunpack.c.l.b16 %v267
        %v352 = vunpack.c.l.b16 %v268
        %v353 = vunpack.c.l.b16 %v269
        %v354 = vunpack.c.l.b16 %v270
        %v355 = vunpack.c.l.b16 %v271
        %v356 = vunpack.c.l.b16 %v272
        %v357 = vpack.c.b16 %v326, %v325
        %v358 = vpack.c.b16 %v328, %v327
        %v359 = vpack.c.b16 %v330, %v329
        %v360 = vpack.c.b16 %v332, %v331
        %v361 = vpack.c.b16 %v334, %v333
        %v362 = vpack.c.b16 %v336, %v335
        %v363 = vpack.c.b16 %v338, %v337
        %v364 = vpack.c.b16 %v340, %v339
        %v365 = vpack.c.b16 %v342, %v341
        %v366 = vpack.c.b16 %v344, %v343
        %v367 = vpack.c.b16 %v346, %v345
        %v368 = vpack.c.b16 %v348, %v347
        %v369 = vpack.c.b16 %v350, %v349
        %v370 = vpack.c.b16 %v352, %v351
        %v371 = vpack.c.b16 %v354, %v353
        %v372 = vpack.c.b16 %v356, %v355
        %389 = vmatprep.subr.bf16.mxu0 0
        %390 = vmatpush1.bf16.msra.mxu0 %v364
        %391 = vmatprep.subr.bf16.mxu0 0
        %392 = vmatpush1.bf16.msra.mxu0 %v363
        %393 = vmatprep.subr.bf16.mxu0 0
        %394 = vmatpush1.bf16.msra.mxu0 %v362
        %395 = vmatprep.subr.bf16.mxu0 0
        %396 = vmatpush1.bf16.msra.mxu0 %v361
        %397 = vmatprep.subr.bf16.mxu0 0
        %398 = vmatpush1.bf16.msra.mxu0 %v360
        %399 = vmatprep.subr.bf16.mxu0 0
        %400 = vmatpush1.bf16.msra.mxu0 %v359
        %401 = vmatprep.subr.bf16.mxu0 0
        %402 = vmatpush1.bf16.msra.mxu0 %v358
        %403 = vmatprep.subr.bf16.mxu0 0
        %404 = vmatpush1.bf16.msra.mxu0 %v357
        %405 = vmatprep.subr.bf16.mxu0 0
        %406 = vmatpush2.bf16.msra.mxu0 %v372
        %407 = vmatprep.subr.bf16.mxu0 0
        %408 = vmatpush2.bf16.msra.mxu0 %v371
        %409 = vmatprep.subr.bf16.mxu0 0
        %410 = vmatpush2.bf16.msra.mxu0 %v370
        %411 = vmatprep.subr.bf16.mxu0 0
        %412 = vmatpush2.bf16.msra.mxu0 %v369
        %413 = vmatprep.subr.bf16.mxu0 0
        %414 = vmatpush2.bf16.msra.mxu0 %v368
        %415 = vmatprep.subr.bf16.mxu0 0
        %416 = vmatpush2.bf16.msra.mxu0 %v367
        %417 = vmatprep.subr.bf16.mxu0 0
        %418 = vmatpush2.bf16.msra.mxu0 %v366
        %419 = vmatprep.subr.bf16.mxu0 0
        %420 = vmatpush2.bf16.msra.mxu0 %v365
        %421 = vmatprep.mubr.bf16.mxu0 %v286
        %422 = vmatmul.mubr.bf16.gmra.mxu0 %v285
        %v423 = vpop.f32.mrf.mxu0
        %v424 = vadd.f32 0.0, %v423
        %v425 = vpop.f32.mrf.mxu0
        %v426 = vpop.f32.mrf.mxu0
        %v427 = vadd.f32 0.0, %v426
        %v428 = vpop.f32.mrf.mxu0
        %429 = vmatprep.mubr.bf16.mxu0 %v288
        %430 = vmatmul.mubr.bf16.gmra.mxu0 %v287
        %v431 = vpop.f32.mrf.mxu0
        %v432 = vadd.f32 0.0, %v431
        %v433 = vpop.f32.mrf.mxu0
        %v434 = vpop.f32.mrf.mxu0
        %v435 = vadd.f32 0.0, %v434
        %v436 = vpop.f32.mrf.mxu0
        %437 = vdwg.mxu0
        %v438 = vadd.f32 %v233, %v424
        %v439 = vadd.f32 %v234, %v427
        %v440 = vadd.f32 %v235, %v432
        %v441 = vadd.f32 %v236, %v435
        %442 = vst [vmem:[#allocation2] sm:$0xff] %v438
        %443 = vst [vmem:[#allocation2 + $0x8] sm:$0xff] %v439
        %444 = vst [vmem:[#allocation2 + $0x10] sm:$0xff] %v440
        %445 = vst [vmem:[#allocation2 + $0x18] sm:$0xff] %v441
        // Predicated region
        $region41: #{tpu_custom_call.1} parent=27 // pred_check
          %p446 = pneg %p225
        $region42: #{tpu_custom_call.1} parent=27 // pred_check_branch
          %448 = sbr.rel (%p446) target = $region44
        $region43: #{tpu_custom_call.1} parent=27 // pred_region
          %v449 = vld [vmem:[#allocation2] sm:$0xff]
          %v450 = vld [vmem:[#allocation2 + $0x8] sm:$0xff]
          %451 = vst [vmem:[%s221] sm:$0xff] %v449
          %452 = vst [vmem:[%s221 + $0x10] sm:$0xff] %v450
          %v453 = vld [vmem:[#allocation2 + $0x10] sm:$0xff]
          %v454 = vld [vmem:[#allocation2 + $0x18] sm:$0xff]
          %455 = vst [vmem:[%s221 + $0x8] sm:$0xff] %v453
          %456 = vst [vmem:[%s221 + $0x18] sm:$0xff] %v454
        $region44: #{tpu_custom_call.1} parent=27 // pred_fallthru
          _
        %s457 = sand.u32 %s98, 1
        %s458 = scalar_lea.sflag [#allocation5], %s457
        %s459 = sand.u32 %s98, 1
        %s460 = smul.addr %s459, 32
        %s461 = scalar_lea.vmem [#allocation8], %s460
        // Predicated region
        $region45: #{tpu_custom_call.1} parent=27 // pred_check
          %p462 = pneg %p108
        $region46: #{tpu_custom_call.1} parent=27 // pred_check_branch
          %464 = sbr.rel (%p462) target = $region48
        $region47: #{tpu_custom_call.1} parent=27 // pred_region
          %s466 = ssub.s32 512, 512
          %467 = vsyncadd %s458, %s466
          %s468 = smul.addr %s26, 4
          %s469 = smul.addr %s468, 128
          %s470 = scalar_lea.hbm %s2, %s469
          %s471 = sshll.u32 %s461, 4
          %s472 = int_to_ptr.vmem [resolvable:$true] %s471
          %477 = dma.vmem_to_hbm [thread:$0]  %s472, 512, %s470, %s458, 256, 256, 16
        $region48: #{tpu_custom_call.1} parent=27 // pred_fallthru
          _
      $region28: #{tpu_custom_call.1} parent=5 // pred_fallthru
        _
      %p478 = scmp.le.s32.totalorder 2, %s17
      // Predicated region
      $region49: #{tpu_custom_call.1} parent=5 // pred_check
        %p479 = pneg %p478
      $region50: #{tpu_custom_call.1} parent=5 // pred_check_branch
        %481 = sbr.rel (%p479) target = $region52
      $region51: #{tpu_custom_call.1} parent=5 // pred_region
        %s482 = ssub.s32 %s17, 2
        // Predicated region
        $region53: #{tpu_custom_call.1} parent=51 // pred_check
          %p483 = pneg %p114
        $region54: #{tpu_custom_call.1} parent=51 // pred_check_branch
          %485 = sbr.rel (%p483) target = $region56
        $region55: #{tpu_custom_call.1} parent=51 // pred_region
          %s486 = sand.u32 %s99, 1
          %s487 = scalar_lea.sflag [#allocation5], %s486
          %s488 = sand.u32 %s99, 1
          %s489 = smul.addr %s488, 32
          %s490 = scalar_lea.vmem [#allocation8], %s489
          %491 = dma.done %s487, 512
        $region56: #{tpu_custom_call.1} parent=51 // pred_fallthru
          _
      $region52: #{tpu_custom_call.1} parent=5 // pred_fallthru
        _
    $region6: #{tpu_custom_call.1} parent=1 // loop_footer
      %s21 = sadd.s32 1, %s17
    $region7: #{tpu_custom_call.1} parent=1 // loop_footer_branch
      %16 = sbr.rel target = $region3
    $region8: #{tpu_custom_call.1} parent=1 // loop_exit
      _
    %492 = vsyncpa [#allocation4], 1
    %s493 = scalar_lea.sflag [#allocation4], 1
    %494 = vsyncpa %s493, 1
    %495 = vsyncpa [#allocation7], 1
    %s496 = scalar_lea.sflag [#allocation7], 1
    %497 = vsyncpa %s496, 1
    %498 = vsyncpa [#allocation5], 1
    %s499 = scalar_lea.sflag [#allocation5], 1
    %500 = vsyncpa %s499, 1

</llo_original>
